<compile_context>
chip_gen: v6e
topology: v6e:2x2x1
jax: 0.10.0
libtpu: 0.0.40
codegen_flags: <defaults>
</compile_context>

<pallas_src>
import functools

import jax
import jax.numpy as jnp
from jax.experimental import pallas as pl
from jax.experimental.pallas import tpu as pltpu

_LANES = 128
_SUBLANES = 8


def _round_up(x: int, m: int) -> int:
    return ((x + m - 1) // m) * m


def _alpha_loss_kernel(z_ref, v_ref, pi_ref, p_ref, out_ref, acc_ref, *, inv_b):
    """Grid = (num_cores, tiles_per_core).

    z_ref / v_ref : full lane-dense value slabs (resident across the grid).
    pi_ref / p_ref: current (tile_rows, 128) lane-dense policy tile.
    out_ref       : this core's (8, 128) partial-sum block.
    acc_ref       : SMEM (1,) f32 running sum for this core.
    """
    core = pl.program_id(0)
    step = pl.program_id(1)

    @pl.when(step == 0)
    def _init():
        acc_ref[0] = jnp.float32(0.0)

    # Value term: computed once (whole Z/V slab is resident), on core 0 only.
    @pl.when((core == 0) & (step == 0))
    def _value():
        d = z_ref[...].astype(jnp.float32) - v_ref[...].astype(jnp.float32)
        acc_ref[0] += jnp.sum(d * d)

    # Policy term for this tile (upcast in-kernel; f32 accumulate).
    # NOTE: matches the naive PyTorch reference; p == 0 still gives -inf/NaN.
    pi = pi_ref[...].astype(jnp.float32)
    p = p_ref[...].astype(jnp.float32)
    acc_ref[0] += jnp.sum(-pi * jnp.log(p))

    @pl.when(step == pl.num_programs(1) - 1)
    def _finalize():
        out_ref[...] = jnp.full(out_ref.shape, acc_ref[0] * inv_b,
                                dtype=out_ref.dtype)


def alpha_loss(Z, Pi, V, P, *, tile_rows=512, num_cores=2):
    """Pallas TPU implementation of AlphaLoss.forward.

    Args:
      Z:  (B, 1) or (B,) game outcomes.
      Pi: (B, A) MCTS action probabilities (targets).
      V:  (B, 1) or (B,) network-predicted values.
      P:  (B, A) network-predicted action probabilities.

    Returns:
      scalar float32 loss.
    """
    B, A = Pi.shape
    assert P.shape == (B, A)
    assert Z.reshape(-1).shape[0] == B and V.reshape(-1).shape[0] == B

    # ---- lane-dense policy slab: flatten (B, A) -> (rows, 128) -------------
    n = B * A
    rows = _round_up(pl.cdiv(n, _LANES), _SUBLANES)
    tr = min(_round_up(tile_rows, _SUBLANES), rows)          # rows per tile
    tiles_per_core = pl.cdiv(pl.cdiv(rows, tr), num_cores)
    rows_pad = num_cores * tiles_per_core * tr
    n_pad = rows_pad * _LANES

    pi_slab = jnp.pad(Pi.reshape(-1), (0, n_pad - n)).reshape(rows_pad, _LANES)
    # pad P with 1 so padded -pi*log(p) == 0 exactly (avoids log(0) NaN).
    p_slab = jnp.pad(P.reshape(-1), (0, n_pad - n),
                     constant_values=1).reshape(rows_pad, _LANES)

    # ---- lane-dense value slab: flatten (B,) -> (rows_z, 128) --------------
    # TODO(synk): tile the Z/V slab too if B ever grows so large (~>4M) that a
    # fully-resident slab no longer fits comfortably in VMEM.
    bz = _round_up(B, _LANES * _SUBLANES)
    rows_z = bz // _LANES
    z_slab = jnp.pad(Z.reshape(-1), (0, bz - B)).reshape(rows_z, _LANES)
    v_slab = jnp.pad(V.reshape(-1), (0, bz - B)).reshape(rows_z, _LANES)

    inv_b = 1.0 / float(B)
    grid = (num_cores, tiles_per_core)

    policy_spec = pl.BlockSpec(
        (tr, _LANES), lambda c, i: (c * tiles_per_core + i, 0))
    value_spec = pl.BlockSpec((rows_z, _LANES), lambda c, i: (0, 0))
    out_spec = pl.BlockSpec((_SUBLANES, _LANES), lambda c, i: (c, 0))

    bytes_accessed = int(
        pi_slab.size * pi_slab.dtype.itemsize
        + p_slab.size * p_slab.dtype.itemsize
        + z_slab.size * z_slab.dtype.itemsize
        + v_slab.size * v_slab.dtype.itemsize
        + num_cores * _SUBLANES * _LANES * 4)

    out = pl.pallas_call(
        functools.partial(_alpha_loss_kernel, inv_b=inv_b),
        out_shape=jax.ShapeDtypeStruct((num_cores * _SUBLANES, _LANES),
                                       jnp.float32),
        grid_spec=pltpu.PrefetchScalarGridSpec(
            num_scalar_prefetch=0,
            grid=grid,
            in_specs=[value_spec, value_spec, policy_spec, policy_spec],
            out_specs=out_spec,
            scratch_shapes=[pltpu.SMEM((1,), jnp.float32)],
        ),
        compiler_params=pltpu.CompilerParams(
            dimension_semantics=("parallel", "arbitrary")),
        cost_estimate=pl.CostEstimate(
            flops=4 * n + 3 * B,
            transcendentals=n,
            bytes_accessed=bytes_accessed),
    )(z_slab, v_slab, pi_slab, p_slab)

    # One partial sum per core (each core fills its own (8, 128) block).
    partials = out[0::_SUBLANES, 0]
    return jnp.sum(partials)


def _reference_alpha_loss(Z, Pi, V, P):
    value_loss = jnp.mean((Z - V) ** 2)
    policy_loss = jnp.mean(jnp.sum(-Pi * jnp.log(P), axis=1))
    return value_loss + policy_loss


if __name__ == "__main__":
    B, A = 8, 32   # batch, action-space size (small, consistent with the module)

    key = jax.random.PRNGKey(0)
    k1, k2, k3, k4 = jax.random.split(key, 4)

    # Game outcomes / predicted values in [-1, 1].
    Z = jax.random.uniform(k1, (B, 1), minval=-1.0, maxval=1.0, dtype=jnp.float32)
    V = jax.random.uniform(k2, (B, 1), minval=-1.0, maxval=1.0, dtype=jnp.float32)

    # Probability distributions over actions (softmax of random logits).
    Pi = jax.nn.softmax(jax.random.normal(k3, (B, A), dtype=jnp.float32), axis=1)
    P = jax.nn.softmax(jax.random.normal(k4, (B, A), dtype=jnp.float32), axis=1)

    loss = alpha_loss(Z, Pi, V, P)
    jax.block_until_ready(loss)
    ref = _reference_alpha_loss(Z, Pi, V, P)
    assert jnp.allclose(loss, ref, rtol=1e-5, atol=1e-5), (loss, ref)

    # bf16 inputs: DMA'd as bf16 (half the HBM bytes), upcast inside the kernel.
    Zb, Vb = Z.astype(jnp.bfloat16), V.astype(jnp.bfloat16)
    Pib, Pb = Pi.astype(jnp.bfloat16), P.astype(jnp.bfloat16)
    loss_bf16 = alpha_loss(Zb, Pib, Vb, Pb)
    jax.block_until_ready(loss_bf16)
    ref_bf16 = _reference_alpha_loss(Zb.astype(jnp.float32),
                                     Pib.astype(jnp.float32),
                                     Vb.astype(jnp.float32),
                                     Pb.astype(jnp.float32))
    assert jnp.allclose(loss_bf16, ref_bf16, rtol=1e-4, atol=1e-4), (loss_bf16, ref_bf16)

    print("KERNEL_OK")
</pallas_src>

<mosaic_0001>
module attributes {stable_mosaic.version = 11 : i64} {
  func.func @_alpha_loss_kernel(%arg0: i32, %arg1: i32, %arg2: memref<8x128xf32, #tpu.memory_space<vmem>>, %arg3: memref<8x128xf32, #tpu.memory_space<vmem>>, %arg4: memref<8x128xf32, #tpu.memory_space<vmem>>, %arg5: memref<8x128xf32, #tpu.memory_space<vmem>>, %arg6: memref<8x128xf32, #tpu.memory_space<vmem>>, %arg7: memref<1xf32, #tpu.memory_space<smem>>) attributes {dimension_semantics = [#tpu.dimension_semantics<parallel>, #tpu.dimension_semantics<arbitrary>], iteration_bounds = array<i64: 2, 1>, scalar_prefetch = 0 : i64, scratch_operands = 1 : i64, tpu.core_type = #tpu.core_type<tc>, window_params = [{pipeline_mode = #tpu.pipeline_mode<synchronous>, transform_indices = @transform_0, window_bounds = array<i64: 8, 128>}, {pipeline_mode = #tpu.pipeline_mode<synchronous>, transform_indices = @transform_1, window_bounds = array<i64: 8, 128>}, {transform_indices = @transform_2, window_bounds = array<i64: 8, 128>}, {transform_indices = @transform_3, window_bounds = array<i64: 8, 128>}, {transform_indices = @transform_4, window_bounds = array<i64: 8, 128>}]} {
    %c0_i32 = arith.constant 0 : i32
    %0 = arith.cmpi eq, %arg1, %c0_i32 : i32
    %1 = arith.extui %0 : i1 to i32
    %c0_i32_0 = arith.constant 0 : i32
    %2 = arith.cmpi ne, %1, %c0_i32_0 : i32
    scf.if %2 {
      %cst_12 = arith.constant 0.000000e+00 : f32
      %c0_13 = arith.constant 0 : index
      %24 = memref.load %arg7[%c0_13] : memref<1xf32, #tpu.memory_space<smem>>
      memref.store %cst_12, %arg7[%c0_13] : memref<1xf32, #tpu.memory_space<smem>>
    } else {
    }
    %c0_i32_1 = arith.constant 0 : i32
    %3 = arith.cmpi eq, %arg0, %c0_i32_1 : i32
    %c0_i32_2 = arith.constant 0 : i32
    %4 = arith.cmpi eq, %arg1, %c0_i32_2 : i32
    %5 = arith.andi %3, %4 : i1
    %6 = arith.extui %5 : i1 to i32
    %c0_i32_3 = arith.constant 0 : i32
    %7 = arith.cmpi ne, %6, %c0_i32_3 : i32
    scf.if %7 {
      %c0_12 = arith.constant 0 : index
      %c0_13 = arith.constant 0 : index
      %24 = vector.load %arg2[%c0_12, %c0_13] : memref<8x128xf32, #tpu.memory_space<vmem>>, vector<8x128xf32>
      %c0_14 = arith.constant 0 : index
      %c0_15 = arith.constant 0 : index
      %25 = vector.load %arg3[%c0_14, %c0_15] : memref<8x128xf32, #tpu.memory_space<vmem>>, vector<8x128xf32>
      %26 = arith.subf %24, %25 : vector<8x128xf32>
      %c0_16 = arith.constant 0 : index
      %27 = memref.load %arg7[%c0_16] : memref<1xf32, #tpu.memory_space<smem>>
      %28 = arith.mulf %26, %26 : vector<8x128xf32>
      %29 = vector.shape_cast %28 : vector<8x128xf32> to vector<1x8x128xf32>
      %cst_17 = arith.constant dense<0.000000e+00> : vector<1xf32>
      %30 = vector.multi_reduction <add>, %29, %cst_17 [1, 2] : vector<1x8x128xf32> to vector<1xf32>
      %31 = vector.shape_cast %30 : vector<1xf32> to vector<1x1x1xf32>
      %32 = vector.extract %31[0, 0, 0] : f32 from vector<1x1x1xf32>
      %33 = arith.addf %27, %32 : f32
      %c0_18 = arith.constant 0 : index
      %34 = memref.load %arg7[%c0_18] : memref<1xf32, #tpu.memory_space<smem>>
      memref.store %33, %arg7[%c0_18] : memref<1xf32, #tpu.memory_space<smem>>
    } else {
    }
    %c0 = arith.constant 0 : index
    %c0_4 = arith.constant 0 : index
    %8 = vector.load %arg4[%c0, %c0_4] : memref<8x128xf32, #tpu.memory_space<vmem>>, vector<8x128xf32>
    %c0_5 = arith.constant 0 : index
    %c0_6 = arith.constant 0 : index
    %9 = vector.load %arg5[%c0_5, %c0_6] : memref<8x128xf32, #tpu.memory_space<vmem>>, vector<8x128xf32>
    %c0_7 = arith.constant 0 : index
    %10 = memref.load %arg7[%c0_7] : memref<1xf32, #tpu.memory_space<smem>>
    %cst = arith.constant 0.000000e+00 : f32
    %11 = vector.broadcast %cst : f32 to vector<8x128xf32>
    %12 = arith.subf %11, %8 : vector<8x128xf32>
    %13 = math.log %9 : vector<8x128xf32>
    %14 = arith.mulf %12, %13 : vector<8x128xf32>
    %15 = vector.shape_cast %14 : vector<8x128xf32> to vector<1x8x128xf32>
    %cst_8 = arith.constant dense<0.000000e+00> : vector<1xf32>
    %16 = vector.multi_reduction <add>, %15, %cst_8 [1, 2] : vector<1x8x128xf32> to vector<1xf32>
    %17 = vector.shape_cast %16 : vector<1xf32> to vector<1x1x1xf32>
    %18 = vector.extract %17[0, 0, 0] : f32 from vector<1x1x1xf32>
    %19 = arith.addf %10, %18 : f32
    %c0_9 = arith.constant 0 : index
    %20 = memref.load %arg7[%c0_9] : memref<1xf32, #tpu.memory_space<smem>>
    memref.store %19, %arg7[%c0_9] : memref<1xf32, #tpu.memory_space<smem>>
    %c0_i32_10 = arith.constant 0 : i32
    %21 = arith.cmpi eq, %arg1, %c0_i32_10 : i32
    %22 = arith.extui %21 : i1 to i32
    %c0_i32_11 = arith.constant 0 : i32
    %23 = arith.cmpi ne, %22, %c0_i32_11 : i32
    scf.if %23 {
      %c0_12 = arith.constant 0 : index
      %24 = memref.load %arg7[%c0_12] : memref<1xf32, #tpu.memory_space<smem>>
      %cst_13 = arith.constant 1.250000e-01 : f32
      %25 = arith.mulf %24, %cst_13 : f32
      %26 = vector.broadcast %25 : f32 to vector<8x128xf32>
      %c0_14 = arith.constant 0 : index
      %c0_15 = arith.constant 0 : index
      %27 = vector.load %arg6[%c0_14, %c0_15] : memref<8x128xf32, #tpu.memory_space<vmem>>, vector<8x128xf32>
      tpu.vector_store %arg6[%c0_14, %c0_15], %26 {strides = array<i32>} : memref<8x128xf32, #tpu.memory_space<vmem>>, vector<8x128xf32>,
    } else {
    }
    return
  }
  func.func @transform_0(%arg0: i32, %arg1: i32) -> (i32, i32) {
    %c0_i32 = arith.constant 0 : i32
    %c0_i32_0 = arith.constant 0 : i32
    %c0_i32_1 = arith.constant 0 : i32
    return %c0_i32, %c0_i32_0 : i32, i32
  }
  func.func @transform_1(%arg0: i32, %arg1: i32) -> (i32, i32) {
    %c0_i32 = arith.constant 0 : i32
    %c0_i32_0 = arith.constant 0 : i32
    %c0_i32_1 = arith.constant 0 : i32
    return %c0_i32, %c0_i32_0 : i32, i32
  }
  func.func @transform_2(%arg0: i32, %arg1: i32) -> (i32, i32) {
    %c1_i32 = arith.constant 1 : i32
    %0 = arith.muli %arg0, %c1_i32 : i32
    %1 = arith.addi %0, %arg1 : i32
    %c0_i32 = arith.constant 0 : i32
    %c0_i32_0 = arith.constant 0 : i32
    return %1, %c0_i32 : i32, i32
  }
  func.func @transform_3(%arg0: i32, %arg1: i32) -> (i32, i32) {
    %c1_i32 = arith.constant 1 : i32
    %0 = arith.muli %arg0, %c1_i32 : i32
    %1 = arith.addi %0, %arg1 : i32
    %c0_i32 = arith.constant 0 : i32
    %c0_i32_0 = arith.constant 0 : i32
    return %1, %c0_i32 : i32, i32
  }
  func.func @transform_4(%arg0: i32, %arg1: i32) -> (i32, i32) {
    %c0_i32 = arith.constant 0 : i32
    %c0_i32_0 = arith.constant 0 : i32
    return %arg0, %c0_i32 : i32, i32
  }
}

</mosaic_0001>

<llo_original>
// kernel: tpu_custom_call.1
$region0: #{tpu_custom_call.1}
  #allocation0 [shape = 'u32[]', space=smem, size = 0x4, offset = 0x4, fixed_abs, tag = 'smem constant byte address 0x4 - core index']
  #allocation1 [shape = 'u32[144,128]{1,0:T(1,128)}', space=vmem, size = 0x12000, scoped, tag = 'internal scratch']
  #allocation2 [shape = 'f32[1]{0:T(128)}', space=smem, size = 0x200, scoped, tag = 'scratch operand']
  %s0 = inlined_call_operand.hbm [shape: f32[8,128], index: 0, kind: input, shape index: {}]
  %s1 = inlined_call_operand.hbm [shape: f32[8,128], index: 1, kind: input, shape index: {}]
  %s2 = inlined_call_operand.hbm [shape: f32[16,128], index: 2, kind: input, shape index: {}]
  %s3 = inlined_call_operand.hbm [shape: f32[16,128], index: 3, kind: input, shape index: {}]
  %s4 = inlined_call_operand.hbm [shape: f32[16,128], index: 4, kind: output, shape index: {}]
  %s5 = sld [smem:[#allocation0]]
  $region77: #{tpu_custom_call.1} parent=0
    _
  %s7 = ssub.s32 1, %s5
  %s8 = scalar_select 0, %s7, %s5
  $region1: #{tpu_custom_call.1} parent=0
    #allocation3 [shape = 'u8[4096]{0}', space=vmem, size = 0x1000, scoped, tag = 'input window, operand 0, single buffered']
    #allocation4 [shape = 's32[2]{0}', space=sflag, size = 0x8, scoped, tag = 'scoped memory for tpu_custom_call.1']
    #allocation5 [shape = 's32[2]{0}', space=sflag, size = 0x8, scoped, tag = 'scoped memory for tpu_custom_call.1']
    #allocation6 [shape = 'u8[4096]{0}', space=vmem, size = 0x1000, scoped, tag = 'input window, operand 1, single buffered']
    #allocation7 [shape = 's32[1]{0}', space=sflag, size = 0x4, scoped, tag = 'scoped memory for tpu_custom_call.1']
    #allocation8 [shape = 'u8[8192]{0}', space=vmem, size = 0x2000, scoped, tag = 'input window, operand 2']
    #allocation9 [shape = 'u8[8192]{0}', space=vmem, size = 0x2000, scoped, tag = 'input window, operand 3']
    #allocation10 [shape = 'u8[8192]{0}', space=vmem, size = 0x2000, scoped, tag = 'output window, operand 0']
    %9 = vsyncpa [#allocation4], 0
    %10 = vsyncpa [#allocation7], 0
    %11 = vsyncpa [#allocation5], 0
    %s12 = scalar_lea.sflag [#allocation5], 1
    %13 = vsyncpa %s12, 0
    loop: start=0, step=1, limit=4
    $region2: #{tpu_custom_call.1} parent=1 // loop_pre_header
      _
    $region3: #{tpu_custom_call.1} parent=1 // loop_header
      %s15 = sphi 0, %s19
      %p16 = scmp.ge.s32.totalorder %s15, 4
      %s22 = sphi 0, %s34
      %s23 = sphi 0, %s30
      %s24 = sphi 0, %s22
      %s25 = sphi 0, %s23
      %s26 = sphi 0, %s24
      %s27 = sphi 0, %s25
      %s35 = sphi 0, %s35
      %s37 = sphi 0, %s35
      %s38 = sphi 0, %s37
      %s52 = sphi 0, %s38
      %s56 = sphi 0, %s56
      %s58 = sphi 0, %s56
      %s59 = sphi 0, %s58
      %s73 = sphi 0, %s59
      %s81 = sphi 0, %s83
      %s84 = sphi 0, %s81
      %s85 = sphi 0, %s84
      %s101 = sphi 0, %s85
      %s109 = sphi 0, %s111
      %s112 = sphi 0, %s109
      %s113 = sphi 0, %s112
      %s129 = sphi 0, %s113
      %s135 = sphi 0, %s137
      %s138 = sphi 0, %s135
      %s139 = sphi 0, %s138
      %s155 = sphi 0, %s139
    $region4: #{tpu_custom_call.1} parent=1 // loop_header_branch
      %18 = sbr.rel (%p16) target = $region8
    $region5: #{tpu_custom_call.1} parent=1 // loop_body
      %s20 = ssub.s32 %s15, 1
      %s21 = ssub.s32 %s15, 2
      %s28 = sadd.s32 1, %s23
      %p29 = scmp.ge.s32.totalorder %s28, 1
      %s30 = scalar_select %p29, 0, %s28
      %s31 = sadd.s32 1, %s22
      %s32 = scalar_select %p29, %s31, %s22
      %p33 = scmp.ge.s32.totalorder %s32, 2
      %s34 = scalar_select %p33, 0, %s32
      %s36 = sadd.s32 %s35, 1
      %p39 = scmp.eq.s32.totalorder %s15, 1
      %p40 = scmp.ne.s32.totalorder %s35, %s37
      %p41 = scmp.eq.s32.totalorder %s15, 0
      %p42 = por %p40, %p41
      %p43 = scmp.ne.s32.totalorder %s35, %s37
      %p44 = scmp.eq.s32.totalorder %s20, 1
      %p45 = por %p43, %p44
      %p46 = scmp.ne.s32.totalorder %s37, %s38
      %p47 = scmp.eq.s32.totalorder %s20, 0
      %p48 = por %p46, %p47
      %p49 = scmp.ne.s32.totalorder %s37, %s38
      %p50 = scmp.eq.s32.totalorder %s21, 1
      %p51 = por %p49, %p50
      %p53 = scmp.ne.s32.totalorder %s38, %s52
      %p54 = scmp.eq.s32.totalorder %s21, 0
      %p55 = por %p53, %p54
      %s57 = sadd.s32 %s56, 1
      %p60 = scmp.eq.s32.totalorder %s15, 1
      %p61 = scmp.ne.s32.totalorder %s56, %s58
      %p62 = scmp.eq.s32.totalorder %s15, 0
      %p63 = por %p61, %p62
      %p64 = scmp.ne.s32.totalorder %s56, %s58
      %p65 = scmp.eq.s32.totalorder %s20, 1
      %p66 = por %p64, %p65
      %p67 = scmp.ne.s32.totalorder %s58, %s59
      %p68 = scmp.eq.s32.totalorder %s20, 0
      %p69 = por %p67, %p68
      %p70 = scmp.ne.s32.totalorder %s58, %s59
      %p71 = scmp.eq.s32.totalorder %s21, 1
      %p72 = por %p70, %p71
      %p74 = scmp.ne.s32.totalorder %s59, %s73
      %p75 = scmp.eq.s32.totalorder %s21, 0
      %p76 = por %p74, %p75
      %s77 = sadd.s32 %s22, %s23
      %s78 = sadd.s32 %s34, %s30
      %s79 = ssub.s32 %s77, %s78
      %p80 = scmp.eq.s32.totalorder %s79, 0
      %s82 = sadd.s32 %s81, 1
      %s83 = scalar_select %p80, %s81, %s82
      %p86 = pneg %p80
      %p87 = scmp.eq.s32.totalorder %s15, 1
      %p88 = por %p86, %p87
      %p89 = scmp.ne.s32.totalorder %s81, %s84
      %p90 = scmp.eq.s32.totalorder %s15, 0
      %p91 = por %p89, %p90
      %p92 = scmp.ne.s32.totalorder %s81, %s84
      %p93 = scmp.eq.s32.totalorder %s20, 1
      %p94 = por %p92, %p93
      %p95 = scmp.ne.s32.totalorder %s84, %s85
      %p96 = scmp.eq.s32.totalorder %s20, 0
      %p97 = por %p95, %p96
      %p98 = scmp.ne.s32.totalorder %s84, %s85
      %p99 = scmp.eq.s32.totalorder %s21, 1
      %p100 = por %p98, %p99
      %p102 = scmp.ne.s32.totalorder %s85, %s101
      %p103 = scmp.eq.s32.totalorder %s21, 0
      %p104 = por %p102, %p103
      %s105 = sadd.s32 %s22, %s23
      %s106 = sadd.s32 %s34, %s30
      %s107 = ssub.s32 %s105, %s106
      %p108 = scmp.eq.s32.totalorder %s107, 0
      %s110 = sadd.s32 %s109, 1
      %s111 = scalar_select %p108, %s109, %s110
      %p114 = pneg %p108
      %p115 = scmp.eq.s32.totalorder %s15, 1
      %p116 = por %p114, %p115
      %p117 = scmp.ne.s32.totalorder %s109, %s112
      %p118 = scmp.eq.s32.totalorder %s15, 0
      %p119 = por %p117, %p118
      %p120 = scmp.ne.s32.totalorder %s109, %s112
      %p121 = scmp.eq.s32.totalorder %s20, 1
      %p122 = por %p120, %p121
      %p123 = scmp.ne.s32.totalorder %s112, %s113
      %p124 = scmp.eq.s32.totalorder %s20, 0
      %p125 = por %p123, %p124
      %p126 = scmp.ne.s32.totalorder %s112, %s113
      %p127 = scmp.eq.s32.totalorder %s21, 1
      %p128 = por %p126, %p127
      %p130 = scmp.ne.s32.totalorder %s113, %s129
      %p131 = scmp.eq.s32.totalorder %s21, 0
      %p132 = por %p130, %p131
      %s133 = ssub.s32 %s22, %s34
      %p134 = scmp.eq.s32.totalorder %s133, 0
      %s136 = sadd.s32 %s135, 1
      %s137 = scalar_select %p134, %s135, %s136
      %p140 = pneg %p134
      %p141 = scmp.eq.s32.totalorder %s15, 1
      %p142 = por %p140, %p141
      %p143 = scmp.ne.s32.totalorder %s135, %s138
      %p144 = scmp.eq.s32.totalorder %s15, 0
      %p145 = por %p143, %p144
      %p146 = scmp.ne.s32.totalorder %s135, %s138
      %p147 = scmp.eq.s32.totalorder %s20, 1
      %p148 = por %p146, %p147
      %p149 = scmp.ne.s32.totalorder %s138, %s139
      %p150 = scmp.eq.s32.totalorder %s20, 0
      %p151 = por %p149, %p150
      %p152 = scmp.ne.s32.totalorder %s138, %s139
      %p153 = scmp.eq.s32.totalorder %s21, 1
      %p154 = por %p152, %p153
      %p156 = scmp.ne.s32.totalorder %s139, %s155
      %p157 = scmp.eq.s32.totalorder %s21, 0
      %p158 = por %p156, %p157
      %p159 = scmp.le.s32.totalorder 1, %s15
      %p160 = scmp.lt.s32.totalorder %s15, 3
      %p161 = pnand %p159, %p160
      %p162 = pneg %p161
      // Predicated region
      $region9: #{tpu_custom_call.1} parent=5 // pred_check
        _
      $region10: #{tpu_custom_call.1} parent=5 // pred_check_branch
        %164 = sbr.rel (%p161) target = $region12
      $region11: #{tpu_custom_call.1} parent=5 // pred_region
        %s165 = ssub.s32 %s15, 1
        // Predicated region
        $region13: #{tpu_custom_call.1} parent=11 // pred_check
          %p166 = pneg %p48
        $region14: #{tpu_custom_call.1} parent=11 // pred_check_branch
          %168 = sbr.rel (%p166) target = $region16
        $region15: #{tpu_custom_call.1} parent=11 // pred_region
          %s170 = ssub.s32 128, 128
          %171 = vsyncadd [#allocation4], %s170
          %s173 = sshll.u32 [#allocation3], 4
          %s174 = int_to_ptr.vmem [resolvable:$true] %s173
          %176 = dma.hbm_to_vmem [thread:$0]  %s0, 128, %s174, [#allocation4]
        $region16: #{tpu_custom_call.1} parent=11 // pred_fallthru
          _
        // Predicated region
        $region17: #{tpu_custom_call.1} parent=11 // pred_check
          %p177 = pneg %p69
        $region18: #{tpu_custom_call.1} parent=11 // pred_check_branch
          %179 = sbr.rel (%p177) target = $region20
        $region19: #{tpu_custom_call.1} parent=11 // pred_region
          %s181 = ssub.s32 128, 128
          %182 = vsyncadd [#allocation7], %s181
          %s184 = sshll.u32 [#allocation6], 4
          %s185 = int_to_ptr.vmem [resolvable:$true] %s184
          %187 = dma.hbm_to_vmem [thread:$0]  %s1, 128, %s185, [#allocation7]
        $region20: #{tpu_custom_call.1} parent=11 // pred_fallthru
          _
      $region12: #{tpu_custom_call.1} parent=5 // pred_fallthru
        _
      %p188 = scmp.lt.s32.totalorder %s15, 2
      // Predicated region
      $region21: #{tpu_custom_call.1} parent=5 // pred_check
        %p189 = pneg %p188
      $region22: #{tpu_custom_call.1} parent=5 // pred_check_branch
        %191 = sbr.rel (%p189) target = $region24
      $region23: #{tpu_custom_call.1} parent=5 // pred_region
        // Predicated region
        $region25: #{tpu_custom_call.1} parent=23 // pred_check
          %p192 = pneg %p91
        $region26: #{tpu_custom_call.1} parent=23 // pred_check_branch
          %194 = sbr.rel (%p192) target = $region28
        $region27: #{tpu_custom_call.1} parent=23 // pred_region
          %s195 = sand.u32 %s15, 1
          %s196 = scalar_lea.sflag [#allocation4], %s195
          %s197 = sand.u32 %s81, 1
          %s198 = smul.addr %s197, 8
          %s199 = scalar_lea.vmem [#allocation8], %s198
          %s200 = sadd.s32 %s22, %s23
          %s202 = ssub.s32 128, 128
          %203 = vsyncadd %s196, %s202
          %s204 = smul.addr %s200, 128
          %s205 = scalar_lea.hbm %s2, %s204
          %s207 = sshll.u32 %s199, 4
          %s208 = int_to_ptr.vmem [resolvable:$true] %s207
          %210 = dma.hbm_to_vmem [thread:$0]  %s205, 128, %s208, %s196
        $region28: #{tpu_custom_call.1} parent=23 // pred_fallthru
          _
        // Predicated region
        $region29: #{tpu_custom_call.1} parent=23 // pred_check
          %p211 = pneg %p119
        $region30: #{tpu_custom_call.1} parent=23 // pred_check_branch
          %213 = sbr.rel (%p211) target = $region32
        $region31: #{tpu_custom_call.1} parent=23 // pred_region
          %s214 = sand.u32 %s15, 1
          %s215 = scalar_lea.sflag [#allocation4], %s214
          %s216 = sand.u32 %s109, 1
          %s217 = smul.addr %s216, 8
          %s218 = scalar_lea.vmem [#allocation9], %s217
          %s219 = sadd.s32 %s22, %s23
          %s221 = ssub.s32 128, 128
          %222 = vsyncadd %s215, %s221
          %s223 = smul.addr %s219, 128
          %s224 = scalar_lea.hbm %s3, %s223
          %s226 = sshll.u32 %s218, 4
          %s227 = int_to_ptr.vmem [resolvable:$true] %s226
          %229 = dma.hbm_to_vmem [thread:$0]  %s224, 128, %s227, %s215
        $region32: #{tpu_custom_call.1} parent=23 // pred_fallthru
          _
      $region24: #{tpu_custom_call.1} parent=5 // pred_fallthru
        _
      %p230 = scmp.le.s32.totalorder 1, %s15
      %p231 = scmp.lt.s32.totalorder %s15, 3
      %p232 = pnand %p230, %p231
      %p233 = pneg %p232
      // Predicated region
      $region33: #{tpu_custom_call.1} parent=5 // pred_check
        _
      $region34: #{tpu_custom_call.1} parent=5 // pred_check_branch
        %235 = sbr.rel (%p232) target = $region36
      $region35: #{tpu_custom_call.1} parent=5 // pred_region
        %s236 = ssub.s32 %s15, 1
        // Predicated region
        $region37: #{tpu_custom_call.1} parent=35 // pred_check
          %p237 = pneg %p48
        $region38: #{tpu_custom_call.1} parent=35 // pred_check_branch
          %239 = sbr.rel (%p237) target = $region40
        $region39: #{tpu_custom_call.1} parent=35 // pred_region
          %240 = dma.done [#allocation4], 128
        $region40: #{tpu_custom_call.1} parent=35 // pred_fallthru
          _
        // Predicated region
        $region41: #{tpu_custom_call.1} parent=35 // pred_check
          %p241 = pneg %p69
        $region42: #{tpu_custom_call.1} parent=35 // pred_check_branch
          %243 = sbr.rel (%p241) target = $region44
        $region43: #{tpu_custom_call.1} parent=35 // pred_region
          %244 = dma.done [#allocation7], 128
        $region44: #{tpu_custom_call.1} parent=35 // pred_fallthru
          _
        %s245 = sand.u32 %s20, 1
        %s246 = scalar_lea.sflag [#allocation4], %s245
        %s247 = sand.u32 %s84, 1
        %s248 = smul.addr %s247, 8
        %s249 = scalar_lea.vmem [#allocation8], %s248
        // Predicated region
        $region45: #{tpu_custom_call.1} parent=35 // pred_check
          %p250 = pneg %p97
        $region46: #{tpu_custom_call.1} parent=35 // pred_check_branch
          %252 = sbr.rel (%p250) target = $region48
        $region47: #{tpu_custom_call.1} parent=35 // pred_region
          %253 = dma.done %s246, 128
        $region48: #{tpu_custom_call.1} parent=35 // pred_fallthru
          _
        %s254 = sand.u32 %s20, 1
        %s255 = scalar_lea.sflag [#allocation4], %s254
        %s256 = sand.u32 %s112, 1
        %s257 = smul.addr %s256, 8
        %s258 = scalar_lea.vmem [#allocation9], %s257
        // Predicated region
        $region49: #{tpu_custom_call.1} parent=35 // pred_check
          %p259 = pneg %p125
        $region50: #{tpu_custom_call.1} parent=35 // pred_check_branch
          %261 = sbr.rel (%p259) target = $region52
        $region51: #{tpu_custom_call.1} parent=35 // pred_region
          %262 = dma.done %s255, 128
        $region52: #{tpu_custom_call.1} parent=35 // pred_fallthru
          _
        %p263 = pneg %p48
        %p264 = pneg %p45
        %p265 = pneg %p69
        %p266 = pneg %p66
        %s267 = sand.u32 %s20, 1
        %s268 = scalar_lea.sflag [#allocation4], %s267
        %s269 = sand.u32 %s84, 1
        %s270 = smul.addr %s269, 8
        %s271 = scalar_lea.vmem [#allocation8], %s270
        %p272 = pneg %p97
        %p273 = pneg %p94
        %s274 = sand.u32 %s20, 1
        %s275 = scalar_lea.sflag [#allocation4], %s274
        %s276 = sand.u32 %s112, 1
        %s277 = smul.addr %s276, 8
        %s278 = scalar_lea.vmem [#allocation9], %s277
        %p279 = pneg %p125
        %p280 = pneg %p122
        %p281 = pneg %p151
        %p282 = pneg %p148
        %s283 = sand.u32 %s138, 1
        %s284 = scalar_lea.sflag [#allocation5], %s283
        %s285 = sand.u32 %s138, 1
        %s286 = smul.addr %s285, 8
        %s287 = scalar_lea.vmem [#allocation10], %s286
        %s288 = sadd.s32 %s24, %s25
        %s289 = sadd.s32 %s24, %s25
        %p290 = scmp.eq.s32.totalorder %s25, 0
        // Predicated region
        $region53: #{tpu_custom_call.1} parent=35 // pred_check
          %p291 = pneg %p290
        $region54: #{tpu_custom_call.1} parent=35 // pred_check_branch
          %293 = sbr.rel (%p291) target = $region56
        $region55: #{tpu_custom_call.1} parent=35 // pred_region
          %s294 = scalar_lea.smem [#allocation2], 0
          %295 = sst [smem:[%s294]] 0.0
        $region56: #{tpu_custom_call.1} parent=35 // pred_fallthru
          _
        %p296 = scmp.eq.s32.totalorder %s24, 0
        %p297 = pnand %p296, %p290
        %p298 = pneg %p297
        // Predicated region
        $region57: #{tpu_custom_call.1} parent=35 // pred_check
          _
        $region58: #{tpu_custom_call.1} parent=35 // pred_check_branch
          %300 = sbr.rel (%p297) target = $region60
        $region59: #{tpu_custom_call.1} parent=35 // pred_region
          %v301 = vld [vmem:[#allocation3] sm:$0xff]
          %v302 = vld [vmem:[#allocation6] sm:$0xff]
          %v303 = vsub.f32 %v301, %v302
          %s304 = sld [smem:[#allocation2]]
          %v305 = vmul.f32 %v303, %v303
          %306 = vadd.xlane.f32.xlu0 %v305
          %v307 = vpop.xlane.xlu0 %306
          %v308 = vrot.slane %v307, 4
          %v309 = vadd.f32 %v307, %v308
          %v310 = vrot.slane %v309, 2
          %v311 = vadd.f32 %v309, %v310
          %v312 = vrot.slane %v311, 1
          %v313 = vadd.f32 %v311, %v312
          %s314 = vtos %v313
          %s315 = sadd.f32 %s304, %s314
          %s316 = scalar_lea.smem [#allocation2], 0
          %317 = sst [smem:[%s316]] %s315
        $region60: #{tpu_custom_call.1} parent=35 // pred_fallthru
          _
        %v318 = vld [vmem:[%s249] sm:$0xff]
        %v319 = vld [vmem:[%s258] sm:$0xff]
        %s320 = sld [smem:[#allocation2]]
        %v321 = vsub.f32 0.0, %v318
        %v322 = vlog2.pop %v319
        %v323 = vmul.f32 %v322, 0.6931472
        %v324 = vmul.f32 %v321, %v323
        %325 = vadd.xlane.f32.xlu0 %v324
        %v326 = vpop.xlane.xlu0 %325
        %v327 = vrot.slane %v326, 4
        %v328 = vadd.f32 %v326, %v327
        %v329 = vrot.slane %v328, 2
        %v330 = vadd.f32 %v328, %v329
        %v331 = vrot.slane %v330, 1
        %v332 = vadd.f32 %v330, %v331
        %s333 = vtos %v332
        %s334 = sadd.f32 %s320, %s333
        %s335 = scalar_lea.smem [#allocation2], 0
        %336 = sst [smem:[%s335]] %s334
        // Predicated region
        $region61: #{tpu_custom_call.1} parent=35 // pred_check
          %p337 = pneg %p290
        $region62: #{tpu_custom_call.1} parent=35 // pred_check_branch
          %339 = sbr.rel (%p337) target = $region64
        $region63: #{tpu_custom_call.1} parent=35 // pred_region
          %s340 = sld [smem:[#allocation2]]
          %s341 = smul.f32 %s340, 0.125
          %v342 = vstv %s341
          %343 = vst [vmem:[%s287] sm:$0xff] %v342
        $region64: #{tpu_custom_call.1} parent=35 // pred_fallthru
          _
        %s344 = sand.u32 %s138, 1
        %s345 = scalar_lea.sflag [#allocation5], %s344
        %s346 = sand.u32 %s138, 1
        %s347 = smul.addr %s346, 8
        %s348 = scalar_lea.vmem [#allocation10], %s347
        // Predicated region
        $region65: #{tpu_custom_call.1} parent=35 // pred_check
          %p349 = pneg %p148
        $region66: #{tpu_custom_call.1} parent=35 // pred_check_branch
          %351 = sbr.rel (%p349) target = $region68
        $region67: #{tpu_custom_call.1} parent=35 // pred_region
          %s353 = ssub.s32 128, 128
          %354 = vsyncadd %s345, %s353
          %s355 = smul.addr %s24, 128
          %s356 = scalar_lea.hbm %s4, %s355
          %s358 = sshll.u32 %s348, 4
          %s359 = int_to_ptr.vmem [resolvable:$true] %s358
          %361 = dma.vmem_to_hbm [thread:$0]  %s359, 128, %s356, %s345
        $region68: #{tpu_custom_call.1} parent=35 // pred_fallthru
          _
      $region36: #{tpu_custom_call.1} parent=5 // pred_fallthru
        _
      %p362 = scmp.le.s32.totalorder 2, %s15
      // Predicated region
      $region69: #{tpu_custom_call.1} parent=5 // pred_check
        %p363 = pneg %p362
      $region70: #{tpu_custom_call.1} parent=5 // pred_check_branch
        %365 = sbr.rel (%p363) target = $region72
      $region71: #{tpu_custom_call.1} parent=5 // pred_region
        %s366 = ssub.s32 %s15, 2
        // Predicated region
        $region73: #{tpu_custom_call.1} parent=71 // pred_check
          %p367 = pneg %p154
        $region74: #{tpu_custom_call.1} parent=71 // pred_check_branch
          %369 = sbr.rel (%p367) target = $region76
        $region75: #{tpu_custom_call.1} parent=71 // pred_region
          %s370 = sand.u32 %s139, 1
          %s371 = scalar_lea.sflag [#allocation5], %s370
          %s372 = sand.u32 %s139, 1
          %s373 = smul.addr %s372, 8
          %s374 = scalar_lea.vmem [#allocation10], %s373
          %375 = dma.done %s371, 128
        $region76: #{tpu_custom_call.1} parent=71 // pred_fallthru
          _
      $region72: #{tpu_custom_call.1} parent=5 // pred_fallthru
        _
    $region6: #{tpu_custom_call.1} parent=1 // loop_footer
      %s19 = sadd.s32 1, %s15
    $region7: #{tpu_custom_call.1} parent=1 // loop_footer_branch
      %14 = sbr.rel target = $region3
    $region8: #{tpu_custom_call.1} parent=1 // loop_exit
      _
    %376 = vsyncpa [#allocation4], 1
    %s377 = scalar_lea.sflag [#allocation4], 1
    %378 = vsyncpa %s377, 1
    %379 = vsyncpa [#allocation7], 1
    %380 = vsyncpa [#allocation5], 1
    %s381 = scalar_lea.sflag [#allocation5], 1
    %382 = vsyncpa %s381, 1

</llo_original>
